<compile_context>
chip_gen: v7x
topology: tpu7x:2x2x1
jax: 0.10.0
libtpu: 0.0.40
codegen_flags: <defaults>
</compile_context>

<pallas_src>
import jax
import jax.numpy as jnp
from jax.experimental import pallas as pl
from jax.experimental.pallas import tpu as pltpu


NEG_SLOPE = 0.01  # torch.nn.LeakyReLU default negative_slope


def _cls_kernel(x_ref, w1_ref, b1_ref, w2_ref, b2_ref, o_ref):
    # Cast x tile to the weight (compute) dtype in-kernel: a no-op when the
    # wrapper already padded/cast it, and cheaper in HBM bytes than a wrapper
    # cast pass when x arrives as f32.
    x = x_ref[...].astype(w1_ref.dtype)
    # First linear (MXU), accumulate in f32.
    h = jnp.dot(x, w1_ref[...], preferred_element_type=jnp.float32)
    h = h + b1_ref[...]                       # bias in f32 (broadcast over rows)
    h = jnp.maximum(h, NEG_SLOPE * h)         # LeakyReLU: single mul + max (VPU, f32)
    # Dropout(0.1): identity at inference time (eval mode).
    # TODO(synk): training-mode dropout would need pltpu.prng_seed/prng_random_bits masking.
    # Second linear (MXU), accumulate in f32.
    out = jnp.dot(h.astype(w2_ref.dtype), w2_ref[...],
                  preferred_element_type=jnp.float32)
    out = out + b2_ref[...]
    o_ref[...] = out.astype(o_ref.dtype)      # downcast only at the final store


def _round_up(v, m):
    return ((v + m - 1) // m) * m


def prepare_params(w1, b1, w2, b2, compute_dtype=jnp.bfloat16):
    """One-time lane-dense padding + cast of the weights/biases.

    Hoisted out of the per-call path so the per-forward HBM traffic is only
    the x stream plus the (already padded) weights.
    w1: [in_dim, hid_dim], w2: [hid_dim, num_cls] (pre-transposed vs nn.Linear).
    """
    in_dim, hid_dim = w1.shape
    num_cls = w2.shape[1]
    cdt = jnp.dtype(compute_dtype)

    in_p = _round_up(in_dim, 128)
    hid_p = _round_up(hid_dim, 128)
    cls_p = _round_up(num_cls, 128)

    w1p = jnp.zeros((in_p, hid_p), cdt).at[:in_dim, :hid_dim].set(w1.astype(cdt))
    w2p = jnp.zeros((hid_p, cls_p), cdt).at[:hid_dim, :num_cls].set(w2.astype(cdt))
    # Biases stay f32 (epilogue precision), 2D so they broadcast over sublanes.
    b1p = jnp.zeros((1, hid_p), jnp.float32).at[0, :hid_dim].set(b1.astype(jnp.float32))
    b2p = jnp.zeros((1, cls_p), jnp.float32).at[0, :num_cls].set(b2.astype(jnp.float32))

    meta = dict(in_dim=in_dim, hid_dim=hid_dim, num_cls=num_cls, compute_dtype=cdt)
    return (w1p, b1p, w2p, b2p), meta


def cls_forward_prepared(x, params, meta, *, block_n=512):
    """x: [N, in_dim] -> logits [N, num_cls] in x.dtype."""
    w1p, b1p, w2p, b2p = params
    in_dim = meta["in_dim"]
    num_cls = meta["num_cls"]
    cdt = meta["compute_dtype"]

    n, x_in = x.shape
    assert x_in == in_dim, (x_in, in_dim)
    out_dtype = x.dtype

    in_p, hid_p = w1p.shape
    cls_p = w2p.shape[1]

    # x: only pad the feature dim when it is not already lane-dense; the pad
    # pass also performs the cast.  N is never padded (ragged last tile OK).
    if in_dim != in_p:
        xk = jnp.zeros((n, in_p), cdt).at[:, :in_dim].set(x.astype(cdt))
    else:
        xk = x  # untouched; cast happens in-kernel

    # Row tile: multiple of 256 (MXU M on v6e/v7x, also 2x the v5e MXU) when
    # the batch is large enough; tiny batches use an 8-multiple single tile.
    block_n = max(256, _round_up(block_n, 256))
    if n >= 256:
        tn = min(block_n, _round_up(n, 256))
    else:
        tn = _round_up(max(n, 1), 8)

    # v7x megacore: keep at least two grid steps when the batch allows it.
    if n >= 512 and pl.cdiv(n, tn) < 2:
        tn = _round_up(pl.cdiv(n, 2), 256)

    xbytes = jnp.dtype(xk.dtype).itemsize
    cbytes = jnp.dtype(cdt).itemsize
    obytes = jnp.dtype(out_dtype).itemsize

    def vmem_bytes(t):
        cast_copy = t * in_p * cbytes if xk.dtype != cdt else 0
        return (2 * t * in_p * xbytes                       # x tile, double-buffered
                + cast_copy                                  # in-kernel cast copy
                + (in_p * hid_p + hid_p * cls_p) * cbytes    # resident weights (1x)
                + (hid_p + cls_p) * 4                        # resident biases (f32)
                + 2 * t * cls_p * obytes                     # out tile, double-buffered
                + t * (hid_p + cls_p) * 4)                   # f32 h / out intermediates

    # Fit the tile to physical VMEM (v7x has 64 MiB/TC vs 128 MiB on v5e/v6e).
    try:
        vmem_cap = int(pltpu.get_tpu_info().vmem_capacity_bytes * 0.75)
    except Exception:
        vmem_cap = 48 << 20   # conservative: fits every generation
    while tn > 256 and vmem_bytes(tn) > vmem_cap:
        tn = max(256, _round_up(tn // 2, 256))

    grid_n = pl.cdiv(n, tn)
    vmem_limit = min(100 << 20,
                     max(32 << 20, int(vmem_bytes(tn) * 1.5) + (4 << 20)))

    cost = pl.CostEstimate(
        flops=2 * n * (in_dim * meta["hid_dim"] + meta["hid_dim"] * num_cls),
        transcendentals=0,
        bytes_accessed=(n * in_p * xbytes
                        + (in_p * hid_p + hid_p * cls_p) * cbytes
                        + (hid_p + cls_p) * 4
                        + n * cls_p * obytes),
    )

    def make_call(single_buffer_weights):
        def resident(shape):
            idx = lambda i: (0, 0)
            if single_buffer_weights:
                try:
                    return pl.BlockSpec(shape, idx, pipeline_mode=pl.Buffered(1))
                except (AttributeError, TypeError):
                    return pl.BlockSpec(shape, idx)
            return pl.BlockSpec(shape, idx)

        return pl.pallas_call(
            _cls_kernel,
            out_shape=jax.ShapeDtypeStruct((n, cls_p), out_dtype),
            grid=(grid_n,),
            in_specs=[
                pl.BlockSpec((tn, in_p), lambda i: (i, 0)),  # x tile: pipelined
                resident((in_p, hid_p)),                     # weights stay resident
                resident((1, hid_p)),
                resident((hid_p, cls_p)),
                resident((1, cls_p)),
            ],
            out_specs=pl.BlockSpec((tn, cls_p), lambda i: (i, 0)),
            compiler_params=pltpu.CompilerParams(
                dimension_semantics=("parallel",),
                vmem_limit_bytes=vmem_limit),
            cost_estimate=cost,
        )

    try:
        out_p = make_call(True)(xk, w1p, b1p, w2p, b2p)
    except Exception:
        # Fallback: default double-buffering for the resident operands.
        out_p = make_call(False)(xk, w1p, b1p, w2p, b2p)

    return out_p[:, :num_cls]


def cls_forward(x, w1, b1, w2, b2, *, block_n=512, compute_dtype=jnp.bfloat16):
    """Convenience wrapper (prepares params per call; hoist prepare_params in prod)."""
    params, meta = prepare_params(w1, b1, w2, b2, compute_dtype=compute_dtype)
    return cls_forward_prepared(x, params, meta, block_n=block_n)


def init_params(key, in_dim, hid_dim, num_cls, dtype=jnp.float32):
    """Deterministic init mimicking nn.Linear's U(-1/sqrt(fan_in), 1/sqrt(fan_in))."""
    k1, k2, k3, k4 = jax.random.split(key, 4)
    bound1 = 1.0 / (in_dim ** 0.5)
    bound2 = 1.0 / (hid_dim ** 0.5)
    w1 = jax.random.uniform(k1, (in_dim, hid_dim), dtype, -bound1, bound1)
    b1 = jax.random.uniform(k2, (hid_dim,), dtype, -bound1, bound1)
    w2 = jax.random.uniform(k3, (hid_dim, num_cls), dtype, -bound2, bound2)
    b2 = jax.random.uniform(k4, (num_cls,), dtype, -bound2, bound2)
    return w1, b1, w2, b2


def reference(x, w1, b1, w2, b2):
    h = x @ w1 + b1
    h = jnp.where(h > 0, h, NEG_SLOPE * h)
    return h @ w2 + b2


if __name__ == "__main__":
    key = jax.random.PRNGKey(0)

    # Case 1: small shapes, f32 compute path -> exact vs reference.
    N, IN_DIM, HID_DIM, NUM_CLS = 8, 32, 32, 8
    kx, kp, kx2, kp2 = jax.random.split(key, 4)
    x = jax.random.normal(kx, (N, IN_DIM), dtype=jnp.float32)
    w1, b1, w2, b2 = init_params(kp, IN_DIM, HID_DIM, NUM_CLS)

    params1, meta1 = prepare_params(w1, b1, w2, b2, compute_dtype=jnp.float32)
    out = jax.block_until_ready(cls_forward_prepared(x, params1, meta1))
    ref = reference(x, w1, b1, w2, b2)
    assert out.shape == (N, NUM_CLS)
    assert jnp.allclose(out, ref, atol=1e-4, rtol=1e-4), "mismatch vs reference (case 1)"

    # Case 2: multi-tile grid (ragged last tile), non-128-aligned features,
    # default bf16 MXU compute (f32 accumulation) -> looser tolerance.
    N2, IN2, HID2, CLS2 = 300, 96, 64, 5
    x2 = jax.random.normal(kx2, (N2, IN2), dtype=jnp.float32)
    p2 = init_params(kp2, IN2, HID2, CLS2)
    params2, meta2 = prepare_params(*p2)  # bf16 default, padded/cast once
    out2 = jax.block_until_ready(cls_forward_prepared(x2, params2, meta2, block_n=256))
    ref2 = reference(x2, *p2)
    assert out2.shape == (N2, CLS2)
    assert jnp.allclose(out2, ref2, atol=5e-2, rtol=5e-2), "mismatch vs reference (case 2)"

    print("KERNEL_OK")
</pallas_src>

<mosaic_0001>
module attributes {stable_mosaic.version = 11 : i64} {
  func.func @_cls_kernel(%arg0: i32, %arg1: memref<8x128xf32, #tpu.memory_space<vmem>>, %arg2: memref<128x128xf32, #tpu.memory_space<vmem>>, %arg3: memref<1x128xf32, #tpu.memory_space<vmem>>, %arg4: memref<128x128xf32, #tpu.memory_space<vmem>>, %arg5: memref<1x128xf32, #tpu.memory_space<vmem>>, %arg6: memref<8x128xf32, #tpu.memory_space<vmem>>) attributes {dimension_semantics = [#tpu.dimension_semantics<parallel>], iteration_bounds = array<i64: 1>, scalar_prefetch = 0 : i64, scratch_operands = 0 : i64, tpu.core_type = #tpu.core_type<tc>, window_params = [{transform_indices = @transform_0, window_bounds = array<i64: 8, 128>}, {pipeline_mode = #tpu.pipeline_mode<synchronous>, transform_indices = @transform_1, window_bounds = array<i64: 128, 128>}, {pipeline_mode = #tpu.pipeline_mode<synchronous>, transform_indices = @transform_2, window_bounds = array<i64: 1, 128>}, {pipeline_mode = #tpu.pipeline_mode<synchronous>, transform_indices = @transform_3, window_bounds = array<i64: 128, 128>}, {pipeline_mode = #tpu.pipeline_mode<synchronous>, transform_indices = @transform_4, window_bounds = array<i64: 1, 128>}, {transform_indices = @transform_5, window_bounds = array<i64: 8, 128>}]} {
    %c0 = arith.constant 0 : index
    %c0_0 = arith.constant 0 : index
    %0 = vector.load %arg1[%c0, %c0_0] : memref<8x128xf32, #tpu.memory_space<vmem>>, vector<8x128xf32>
    %c0_1 = arith.constant 0 : index
    %c0_2 = arith.constant 0 : index
    %1 = vector.load %arg2[%c0_1, %c0_2] : memref<128x128xf32, #tpu.memory_space<vmem>>, vector<128x128xf32>
    %cst = arith.constant dense<0.000000e+00> : vector<8x128xf32>
    %2 = tpu.matmul %0, %1, %cst {dimension_numbers = #tpu.dot_dimension_numbers<[1], [0], [0], [1], [0, 0, 1, 1], [], []>} : vector<8x128xf32>, vector<128x128xf32>, vector<8x128xf32> -> vector<8x128xf32>
    %c0_3 = arith.constant 0 : index
    %c0_4 = arith.constant 0 : index
    %3 = vector.load %arg3[%c0_3, %c0_4] : memref<1x128xf32, #tpu.memory_space<vmem>>, vector<1x128xf32>
    %4 = vector.broadcast %3 : vector<1x128xf32> to vector<8x128xf32>
    %5 = arith.addf %2, %4 : vector<8x128xf32>
    %cst_5 = arith.constant 0.00999999977 : f32
    %6 = vector.broadcast %cst_5 : f32 to vector<8x128xf32>
    %7 = arith.mulf %6, %5 : vector<8x128xf32>
    %8 = arith.maximumf %5, %7 : vector<8x128xf32>
    %c0_6 = arith.constant 0 : index
    %c0_7 = arith.constant 0 : index
    %9 = vector.load %arg4[%c0_6, %c0_7] : memref<128x128xf32, #tpu.memory_space<vmem>>, vector<128x128xf32>
    %cst_8 = arith.constant dense<0.000000e+00> : vector<8x128xf32>
    %10 = tpu.matmul %8, %9, %cst_8 {dimension_numbers = #tpu.dot_dimension_numbers<[1], [0], [0], [1], [0, 0, 1, 1], [], []>} : vector<8x128xf32>, vector<128x128xf32>, vector<8x128xf32> -> vector<8x128xf32>
    %c0_9 = arith.constant 0 : index
    %c0_10 = arith.constant 0 : index
    %11 = vector.load %arg5[%c0_9, %c0_10] : memref<1x128xf32, #tpu.memory_space<vmem>>, vector<1x128xf32>
    %12 = vector.broadcast %11 : vector<1x128xf32> to vector<8x128xf32>
    %13 = arith.addf %10, %12 : vector<8x128xf32>
    %c0_11 = arith.constant 0 : index
    %c0_12 = arith.constant 0 : index
    %14 = vector.load %arg6[%c0_11, %c0_12] : memref<8x128xf32, #tpu.memory_space<vmem>>, vector<8x128xf32>
    tpu.vector_store %arg6[%c0_11, %c0_12], %13 {strides = array<i32>} : memref<8x128xf32, #tpu.memory_space<vmem>>, vector<8x128xf32>,
    return
  }
  func.func @transform_0(%arg0: i32) -> (i32, i32) {
    %c0_i32 = arith.constant 0 : i32
    %c0_i32_0 = arith.constant 0 : i32
    return %arg0, %c0_i32 : i32, i32
  }
  func.func @transform_1(%arg0: i32) -> (i32, i32) {
    %c0_i32 = arith.constant 0 : i32
    %c0_i32_0 = arith.constant 0 : i32
    %c0_i32_1 = arith.constant 0 : i32
    return %c0_i32, %c0_i32_0 : i32, i32
  }
  func.func @transform_2(%arg0: i32) -> (i32, i32) {
    %c0_i32 = arith.constant 0 : i32
    %c0_i32_0 = arith.constant 0 : i32
    %c0_i32_1 = arith.constant 0 : i32
    return %c0_i32, %c0_i32_0 : i32, i32
  }
  func.func @transform_3(%arg0: i32) -> (i32, i32) {
    %c0_i32 = arith.constant 0 : i32
    %c0_i32_0 = arith.constant 0 : i32
    %c0_i32_1 = arith.constant 0 : i32
    return %c0_i32, %c0_i32_0 : i32, i32
  }
  func.func @transform_4(%arg0: i32) -> (i32, i32) {
    %c0_i32 = arith.constant 0 : i32
    %c0_i32_0 = arith.constant 0 : i32
    %c0_i32_1 = arith.constant 0 : i32
    return %c0_i32, %c0_i32_0 : i32, i32
  }
  func.func @transform_5(%arg0: i32) -> (i32, i32) {
    %c0_i32 = arith.constant 0 : i32
    %c0_i32_0 = arith.constant 0 : i32
    return %arg0, %c0_i32 : i32, i32
  }
}

module attributes {stable_mosaic.version = 11 : i64} {
  func.func @_cls_kernel(%arg0: i32, %arg1: memref<8x128xf32, #tpu.memory_space<vmem>>, %arg2: memref<128x128xf32, #tpu.memory_space<vmem>>, %arg3: memref<1x128xf32, #tpu.memory_space<vmem>>, %arg4: memref<128x128xf32, #tpu.memory_space<vmem>>, %arg5: memref<1x128xf32, #tpu.memory_space<vmem>>, %arg6: memref<8x128xf32, #tpu.memory_space<vmem>>) attributes {dimension_semantics = [#tpu.dimension_semantics<parallel>], iteration_bounds = array<i64: 1>, scalar_prefetch = 0 : i64, scratch_operands = 0 : i64, tpu.core_type = #tpu.core_type<tc>, window_params = [{transform_indices = @transform_0, window_bounds = array<i64: 8, 128>}, {pipeline_mode = #tpu.pipeline_mode<synchronous>, transform_indices = @transform_1, window_bounds = array<i64: 128, 128>}, {pipeline_mode = #tpu.pipeline_mode<synchronous>, transform_indices = @transform_2, window_bounds = array<i64: 1, 128>}, {pipeline_mode = #tpu.pipeline_mode<synchronous>, transform_indices = @transform_3, window_bounds = array<i64: 128, 128>}, {pipeline_mode = #tpu.pipeline_mode<synchronous>, transform_indices = @transform_4, window_bounds = array<i64: 1, 128>}, {transform_indices = @transform_5, window_bounds = array<i64: 8, 128>}]} {
    %c0 = arith.constant 0 : index
    %c0_0 = arith.constant 0 : index
    %0 = vector.load %arg1[%c0, %c0_0] : memref<8x128xf32, #tpu.memory_space<vmem>>, vector<8x128xf32>
    %c0_1 = arith.constant 0 : index
    %c0_2 = arith.constant 0 : index
    %1 = vector.load %arg2[%c0_1, %c0_2] : memref<128x128xf32, #tpu.memory_space<vmem>>, vector<128x128xf32>
    %cst = arith.constant dense<0.000000e+00> : vector<8x128xf32>
    %2 = tpu.matmul %0, %1, %cst {dimension_numbers = #tpu.dot_dimension_numbers<[1], [0], [0], [1], [0, 0, 1, 1], [], []>} : vector<8x128xf32>, vector<128x128xf32>, vector<8x128xf32> -> vector<8x128xf32>
    %c0_3 = arith.constant 0 : index
    %c0_4 = arith.constant 0 : index
    %3 = vector.load %arg3[%c0_3, %c0_4] : memref<1x128xf32, #tpu.memory_space<vmem>>, vector<1x128xf32>
    %4 = vector.broadcast %3 : vector<1x128xf32> to vector<8x128xf32>
    %5 = arith.addf %2, %4 : vector<8x128xf32>
    %cst_5 = arith.constant 0.00999999977 : f32
    %6 = vector.broadcast %cst_5 : f32 to vector<8x128xf32>
    %7 = arith.mulf %6, %5 : vector<8x128xf32>
    %8 = arith.maximumf %5, %7 : vector<8x128xf32>
    %c0_6 = arith.constant 0 : index
    %c0_7 = arith.constant 0 : index
    %9 = vector.load %arg4[%c0_6, %c0_7] : memref<128x128xf32, #tpu.memory_space<vmem>>, vector<128x128xf32>
    %cst_8 = arith.constant dense<0.000000e+00> : vector<8x128xf32>
    %10 = tpu.matmul %8, %9, %cst_8 {dimension_numbers = #tpu.dot_dimension_numbers<[1], [0], [0], [1], [0, 0, 1, 1], [], []>} : vector<8x128xf32>, vector<128x128xf32>, vector<8x128xf32> -> vector<8x128xf32>
    %c0_9 = arith.constant 0 : index
    %c0_10 = arith.constant 0 : index
    %11 = vector.load %arg5[%c0_9, %c0_10] : memref<1x128xf32, #tpu.memory_space<vmem>>, vector<1x128xf32>
    %12 = vector.broadcast %11 : vector<1x128xf32> to vector<8x128xf32>
    %13 = arith.addf %10, %12 : vector<8x128xf32>
    %c0_11 = arith.constant 0 : index
    %c0_12 = arith.constant 0 : index
    %14 = vector.load %arg6[%c0_11, %c0_12] : memref<8x128xf32, #tpu.memory_space<vmem>>, vector<8x128xf32>
    tpu.vector_store %arg6[%c0_11, %c0_12], %13 {strides = array<i32>} : memref<8x128xf32, #tpu.memory_space<vmem>>, vector<8x128xf32>,
    return
  }
  func.func @transform_0(%arg0: i32) -> (i32, i32) {
    %c0_i32 = arith.constant 0 : i32
    %c0_i32_0 = arith.constant 0 : i32
    return %arg0, %c0_i32 : i32, i32
  }
  func.func @transform_1(%arg0: i32) -> (i32, i32) {
    %c0_i32 = arith.constant 0 : i32
    %c0_i32_0 = arith.constant 0 : i32
    %c0_i32_1 = arith.constant 0 : i32
    return %c0_i32, %c0_i32_0 : i32, i32
  }
  func.func @transform_2(%arg0: i32) -> (i32, i32) {
    %c0_i32 = arith.constant 0 : i32
    %c0_i32_0 = arith.constant 0 : i32
    %c0_i32_1 = arith.constant 0 : i32
    return %c0_i32, %c0_i32_0 : i32, i32
  }
  func.func @transform_3(%arg0: i32) -> (i32, i32) {
    %c0_i32 = arith.constant 0 : i32
    %c0_i32_0 = arith.constant 0 : i32
    %c0_i32_1 = arith.constant 0 : i32
    return %c0_i32, %c0_i32_0 : i32, i32
  }
  func.func @transform_4(%arg0: i32) -> (i32, i32) {
    %c0_i32 = arith.constant 0 : i32
    %c0_i32_0 = arith.constant 0 : i32
    %c0_i32_1 = arith.constant 0 : i32
    return %c0_i32, %c0_i32_0 : i32, i32
  }
  func.func @transform_5(%arg0: i32) -> (i32, i32) {
    %c0_i32 = arith.constant 0 : i32
    %c0_i32_0 = arith.constant 0 : i32
    return %arg0, %c0_i32 : i32, i32
  }
}

</mosaic_0001>

<llo_original>
// kernel: tpu_custom_call.1
$region0: #{tpu_custom_call.1}
  #allocation0 [shape = 'u32[]', space=smem, size = 0x4, offset = 0x4, fixed_abs, tag = 'smem constant byte address 0x4 - core index']
  #allocation1 [shape = 'u32[144,128]{1,0:T(1,128)}', space=vmem, size = 0x12000, scoped, tag = 'internal scratch']
  %s0 = inlined_call_operand.hbm [shape: f32[8,128], index: 0, kind: input, shape index: {}]
  %s1 = inlined_call_operand.hbm [shape: f32[128,128], index: 1, kind: input, shape index: {}]
  %s2 = inlined_call_operand.vmem [shape: f32[1,128], index: 2, kind: input, shape index: {}]
  %s3 = inlined_call_operand.hbm [shape: f32[128,128], index: 3, kind: input, shape index: {}]
  %s4 = inlined_call_operand.vmem [shape: f32[1,128], index: 4, kind: input, shape index: {}]
  %s5 = inlined_call_operand.hbm [shape: f32[8,128], index: 5, kind: output, shape index: {}]
  %s6 = sld [smem:[#allocation0]]
  $region42: #{tpu_custom_call.1} parent=0
    _
  %s8 = ssub.s32 1, %s6
  %s9 = scalar_select 0, %s8, %s6
  $region1: #{tpu_custom_call.1} parent=0
    #allocation2 [shape = 'u8[4096]{0}', space=vmem, size = 0x1000, scoped, tag = 'input window, operand 0, single buffered']
    #allocation3 [shape = 's32[1]{0}', space=sflag, size = 0x4, scoped, tag = 'scoped memory for tpu_custom_call.1']
    #allocation4 [shape = 's32[1]{0}', space=sflag, size = 0x4, scoped, tag = 'scoped memory for tpu_custom_call.1']
    #allocation5 [shape = 'u8[65536]{0}', space=vmem, size = 0x10000, scoped, tag = 'input window, operand 1, single buffered']
    #allocation6 [shape = 's32[1]{0}', space=sflag, size = 0x4, scoped, tag = 'scoped memory for tpu_custom_call.1']
    #allocation7 [shape = 'u8[65536]{0}', space=vmem, size = 0x10000, scoped, tag = 'input window, operand 3, single buffered']
    #allocation8 [shape = 'u8[4096]{0}', space=vmem, size = 0x1000, scoped, tag = 'output window, operand 0, single buffered']
    %10 = vsyncpa [#allocation3], 0
    %11 = vsyncpa [#allocation6], 0
    %12 = vsyncpa [#allocation4], 0
    // Predicated region
    $region2: #{tpu_custom_call.1} parent=1 // pred_check
      _
    $region3: #{tpu_custom_call.1} parent=1 // pred_check_branch
      %14 = sbr.rel (0) target = $region5
    $region4: #{tpu_custom_call.1} parent=1 // pred_region
      %s16 = ssub.s32 128, 128
      %17 = vsyncadd [#allocation3], %s16
      %s19 = sshll.u32 [#allocation2], 4
      %s20 = int_to_ptr.vmem [resolvable:$true] %s19
      %22 = dma.hbm_to_vmem [thread:$0]  %s0, 128, %s20, [#allocation3]
    $region5: #{tpu_custom_call.1} parent=1 // pred_fallthru
      _
    // Predicated region
    $region6: #{tpu_custom_call.1} parent=1 // pred_check
      _
    $region7: #{tpu_custom_call.1} parent=1 // pred_check_branch
      %24 = sbr.rel (0) target = $region9
    $region8: #{tpu_custom_call.1} parent=1 // pred_region
      %s26 = ssub.s32 2048, 2048
      %27 = vsyncadd [#allocation6], %s26
      %s28 = sshll.u32 [#allocation5], 4
      %s29 = int_to_ptr.vmem [resolvable:$true] %s28
      %34 = dma.hbm_to_vmem [thread:$0]  %s1, 2048, %s29, [#allocation6], 128, 128, 8
    $region9: #{tpu_custom_call.1} parent=1 // pred_fallthru
      _
    // Predicated region
    $region10: #{tpu_custom_call.1} parent=1 // pred_check
      _
    $region11: #{tpu_custom_call.1} parent=1 // pred_check_branch
      %36 = sbr.rel (0) target = $region13
    $region12: #{tpu_custom_call.1} parent=1 // pred_region
      _
    $region13: #{tpu_custom_call.1} parent=1 // pred_fallthru
      _
    // Predicated region
    $region14: #{tpu_custom_call.1} parent=1 // pred_check
      _
    $region15: #{tpu_custom_call.1} parent=1 // pred_check_branch
      %38 = sbr.rel (0) target = $region17
    $region16: #{tpu_custom_call.1} parent=1 // pred_region
      %s40 = ssub.s32 2048, 2048
      %41 = vsyncadd [#allocation6], %s40
      %s42 = sshll.u32 [#allocation7], 4
      %s43 = int_to_ptr.vmem [resolvable:$true] %s42
      %48 = dma.hbm_to_vmem [thread:$0]  %s3, 2048, %s43, [#allocation6], 128, 128, 8
    $region17: #{tpu_custom_call.1} parent=1 // pred_fallthru
      _
    // Predicated region
    $region18: #{tpu_custom_call.1} parent=1 // pred_check
      _
    $region19: #{tpu_custom_call.1} parent=1 // pred_check_branch
      %50 = sbr.rel (0) target = $region21
    $region20: #{tpu_custom_call.1} parent=1 // pred_region
      _
    $region21: #{tpu_custom_call.1} parent=1 // pred_fallthru
      _
    // Predicated region
    $region22: #{tpu_custom_call.1} parent=1 // pred_check
      _
    $region23: #{tpu_custom_call.1} parent=1 // pred_check_branch
      %52 = sbr.rel (0) target = $region25
    $region24: #{tpu_custom_call.1} parent=1 // pred_region
      %53 = dma.done [#allocation3], 128
    $region25: #{tpu_custom_call.1} parent=1 // pred_fallthru
      _
    // Predicated region
    $region26: #{tpu_custom_call.1} parent=1 // pred_check
      _
    $region27: #{tpu_custom_call.1} parent=1 // pred_check_branch
      %55 = sbr.rel (0) target = $region29
    $region28: #{tpu_custom_call.1} parent=1 // pred_region
      %56 = dma.done [#allocation6], 2048
    $region29: #{tpu_custom_call.1} parent=1 // pred_fallthru
      _
    // Predicated region
    $region30: #{tpu_custom_call.1} parent=1 // pred_check
      _
    $region31: #{tpu_custom_call.1} parent=1 // pred_check_branch
      %58 = sbr.rel (0) target = $region33
    $region32: #{tpu_custom_call.1} parent=1 // pred_region
      %59 = dma.done [#allocation6], 2048
    $region33: #{tpu_custom_call.1} parent=1 // pred_fallthru
      _
    %v60 = vld [vmem:[#allocation2] sm:$0xff]
    %v61 = vld [vmem:[#allocation5] sm:$0xff]
    %v62 = vld [vmem:[#allocation5 + $0x8] sm:$0xff]
    %v63 = vld [vmem:[#allocation5 + $0x10] sm:$0xff]
    %v64 = vld [vmem:[#allocation5 + $0x18] sm:$0xff]
    %v65 = vld [vmem:[#allocation5 + $0x20] sm:$0xff]
    %v66 = vld [vmem:[#allocation5 + $0x28] sm:$0xff]
    %v67 = vld [vmem:[#allocation5 + $0x30] sm:$0xff]
    %v68 = vld [vmem:[#allocation5 + $0x38] sm:$0xff]
    %v69 = vld [vmem:[#allocation5 + $0x40] sm:$0xff]
    %v70 = vld [vmem:[#allocation5 + $0x48] sm:$0xff]
    %v71 = vld [vmem:[#allocation5 + $0x50] sm:$0xff]
    %v72 = vld [vmem:[#allocation5 + $0x58] sm:$0xff]
    %v73 = vld [vmem:[#allocation5 + $0x60] sm:$0xff]
    %v74 = vld [vmem:[#allocation5 + $0x68] sm:$0xff]
    %v75 = vld [vmem:[#allocation5 + $0x70] sm:$0xff]
    %v76 = vld [vmem:[#allocation5 + $0x78] sm:$0xff]
    %v77 = vld [vmem:[%s2] sm:$0x1]
    %v79 = vlaneseq
    %v80 = vshrl.u32 %v79, 7
    %v81 = vsub.s32 0, %v80
    %v82 = vrot.slane %v77, %v81
    %84 = vmatprep.subr.mxu0 0.0
    %85 = vmatpush1.msra.mxu0 %v61
    %86 = vmatprep.subr.mxu0 0.0
    %87 = vmatpush1.msra.mxu0 %v62
    %88 = vmatprep.subr.mxu0 0.0
    %89 = vmatpush1.msra.mxu0 %v63
    %90 = vmatprep.subr.mxu0 0.0
    %91 = vmatpush1.msra.mxu0 %v64
    %92 = vmatprep.subr.mxu0 0.0
    %93 = vmatpush1.msra.mxu0 %v65
    %94 = vmatprep.subr.mxu0 0.0
    %95 = vmatpush1.msra.mxu0 %v66
    %96 = vmatprep.subr.mxu0 0.0
    %97 = vmatpush1.msra.mxu0 %v67
    %98 = vmatprep.subr.mxu0 0.0
    %99 = vmatpush1.msra.mxu0 %v68
    %100 = vmatprep.subr.mxu0 0.0
    %101 = vmatpush1.msra.mxu0 %v69
    %102 = vmatprep.subr.mxu0 0.0
    %103 = vmatpush1.msra.mxu0 %v70
    %104 = vmatprep.subr.mxu0 0.0
    %105 = vmatpush1.msra.mxu0 %v71
    %106 = vmatprep.subr.mxu0 0.0
    %107 = vmatpush1.msra.mxu0 %v72
    %108 = vmatprep.subr.mxu0 0.0
    %109 = vmatpush1.msra.mxu0 %v73
    %110 = vmatprep.subr.mxu0 0.0
    %111 = vmatpush1.msra.mxu0 %v74
    %112 = vmatprep.subr.mxu0 0.0
    %113 = vmatpush1.msra.mxu0 %v75
    %114 = vmatprep.subr.mxu0 0.0
    %115 = vmatpush1.msra.mxu0 %v76
    %116 = vmatprep.subr.mxu0 0.0
    %117 = vmatpush1.msra.mxu0 0.0
    %118 = vmatprep.subr.mxu0 0.0
    %119 = vmatpush1.msra.mxu0 0.0
    %120 = vmatprep.subr.mxu0 0.0
    %121 = vmatpush1.msra.mxu0 0.0
    %122 = vmatprep.subr.mxu0 0.0
    %123 = vmatpush1.msra.mxu0 0.0
    %124 = vmatprep.subr.mxu0 0.0
    %125 = vmatpush1.msra.mxu0 0.0
    %126 = vmatprep.subr.mxu0 0.0
    %127 = vmatpush1.msra.mxu0 0.0
    %128 = vmatprep.subr.mxu0 0.0
    %129 = vmatpush1.msra.mxu0 0.0
    %130 = vmatprep.subr.mxu0 0.0
    %131 = vmatpush1.msra.mxu0 0.0
    %132 = vmatprep.subr.mxu0 0.0
    %133 = vmatpush1.msra.mxu0 0.0
    %134 = vmatprep.subr.mxu0 0.0
    %135 = vmatpush1.msra.mxu0 0.0
    %136 = vmatprep.subr.mxu0 0.0
    %137 = vmatpush1.msra.mxu0 0.0
    %138 = vmatprep.subr.mxu0 0.0
    %139 = vmatpush1.msra.mxu0 0.0
    %140 = vmatprep.subr.mxu0 0.0
    %141 = vmatpush1.msra.mxu0 0.0
    %142 = vmatprep.subr.mxu0 0.0
    %143 = vmatpush1.msra.mxu0 0.0
    %144 = vmatprep.subr.mxu0 0.0
    %145 = vmatpush1.msra.mxu0 0.0
    %146 = vmatprep.subr.mxu0 0.0
    %147 = vmatpush1.msra.mxu0 0.0
    %148 = vmatprep.mubr.f32.mxu0 0.0
    %149 = vmatmul.mubr.f32.gmra.mrb[0].mxu0 %v60
    %v150 = vpop.f32.mrb[0].mxu0
    %v151 = vadd.f32 %v82, %v150
    %v152 = vpop.f32.mrb[0].mxu0
    %153 = vdwg.mxu0
    %v154 = vmul.f32 %v151, 0.01
    %v155 = vmax.f32 %v151, %v154
    %v156 = vld [vmem:[#allocation7] sm:$0xff]
    %v157 = vld [vmem:[#allocation7 + $0x8] sm:$0xff]
    %v158 = vld [vmem:[#allocation7 + $0x10] sm:$0xff]
    %v159 = vld [vmem:[#allocation7 + $0x18] sm:$0xff]
    %v160 = vld [vmem:[#allocation7 + $0x20] sm:$0xff]
    %v161 = vld [vmem:[#allocation7 + $0x28] sm:$0xff]
    %v162 = vld [vmem:[#allocation7 + $0x30] sm:$0xff]
    %v163 = vld [vmem:[#allocation7 + $0x38] sm:$0xff]
    %v164 = vld [vmem:[#allocation7 + $0x40] sm:$0xff]
    %v165 = vld [vmem:[#allocation7 + $0x48] sm:$0xff]
    %v166 = vld [vmem:[#allocation7 + $0x50] sm:$0xff]
    %v167 = vld [vmem:[#allocation7 + $0x58] sm:$0xff]
    %v168 = vld [vmem:[#allocation7 + $0x60] sm:$0xff]
    %v169 = vld [vmem:[#allocation7 + $0x68] sm:$0xff]
    %v170 = vld [vmem:[#allocation7 + $0x70] sm:$0xff]
    %v171 = vld [vmem:[#allocation7 + $0x78] sm:$0xff]
    %v172 = vld [vmem:[%s4] sm:$0x1]
    %v174 = vlaneseq
    %v175 = vshrl.u32 %v174, 7
    %v176 = vsub.s32 0, %v175
    %v177 = vrot.slane %v172, %v176
    %179 = vmatprep.subr.mxu0 0.0
    %180 = vmatpush1.msra.mxu0 %v156
    %181 = vmatprep.subr.mxu0 0.0
    %182 = vmatpush1.msra.mxu0 %v157
    %183 = vmatprep.subr.mxu0 0.0
    %184 = vmatpush1.msra.mxu0 %v158
    %185 = vmatprep.subr.mxu0 0.0
    %186 = vmatpush1.msra.mxu0 %v159
    %187 = vmatprep.subr.mxu0 0.0
    %188 = vmatpush1.msra.mxu0 %v160
    %189 = vmatprep.subr.mxu0 0.0
    %190 = vmatpush1.msra.mxu0 %v161
    %191 = vmatprep.subr.mxu0 0.0
    %192 = vmatpush1.msra.mxu0 %v162
    %193 = vmatprep.subr.mxu0 0.0
    %194 = vmatpush1.msra.mxu0 %v163
    %195 = vmatprep.subr.mxu0 0.0
    %196 = vmatpush1.msra.mxu0 %v164
    %197 = vmatprep.subr.mxu0 0.0
    %198 = vmatpush1.msra.mxu0 %v165
    %199 = vmatprep.subr.mxu0 0.0
    %200 = vmatpush1.msra.mxu0 %v166
    %201 = vmatprep.subr.mxu0 0.0
    %202 = vmatpush1.msra.mxu0 %v167
    %203 = vmatprep.subr.mxu0 0.0
    %204 = vmatpush1.msra.mxu0 %v168
    %205 = vmatprep.subr.mxu0 0.0
    %206 = vmatpush1.msra.mxu0 %v169
    %207 = vmatprep.subr.mxu0 0.0
    %208 = vmatpush1.msra.mxu0 %v170
    %209 = vmatprep.subr.mxu0 0.0
    %210 = vmatpush1.msra.mxu0 %v171
    %211 = vmatprep.subr.mxu0 0.0
    %212 = vmatpush1.msra.mxu0 0.0
    %213 = vmatprep.subr.mxu0 0.0
    %214 = vmatpush1.msra.mxu0 0.0
    %215 = vmatprep.subr.mxu0 0.0
    %216 = vmatpush1.msra.mxu0 0.0
    %217 = vmatprep.subr.mxu0 0.0
    %218 = vmatpush1.msra.mxu0 0.0
    %219 = vmatprep.subr.mxu0 0.0
    %220 = vmatpush1.msra.mxu0 0.0
    %221 = vmatprep.subr.mxu0 0.0
    %222 = vmatpush1.msra.mxu0 0.0
    %223 = vmatprep.subr.mxu0 0.0
    %224 = vmatpush1.msra.mxu0 0.0
    %225 = vmatprep.subr.mxu0 0.0
    %226 = vmatpush1.msra.mxu0 0.0
    %227 = vmatprep.subr.mxu0 0.0
    %228 = vmatpush1.msra.mxu0 0.0
    %229 = vmatprep.subr.mxu0 0.0
    %230 = vmatpush1.msra.mxu0 0.0
    %231 = vmatprep.subr.mxu0 0.0
    %232 = vmatpush1.msra.mxu0 0.0
    %233 = vmatprep.subr.mxu0 0.0
    %234 = vmatpush1.msra.mxu0 0.0
    %235 = vmatprep.subr.mxu0 0.0
    %236 = vmatpush1.msra.mxu0 0.0
    %237 = vmatprep.subr.mxu0 0.0
    %238 = vmatpush1.msra.mxu0 0.0
    %239 = vmatprep.subr.mxu0 0.0
    %240 = vmatpush1.msra.mxu0 0.0
    %241 = vmatprep.subr.mxu0 0.0
    %242 = vmatpush1.msra.mxu0 0.0
    %243 = vmatprep.mubr.f32.mxu0 0.0
    %244 = vmatmul.mubr.f32.gmra.mrb[0].mxu0 %v155
    %v245 = vpop.f32.mrb[0].mxu0
    %v246 = vadd.f32 %v177, %v245
    %v247 = vpop.f32.mrb[0].mxu0
    %248 = vdwg.mxu0
    %249 = vst [vmem:[#allocation8] sm:$0xff] %v246
    // Predicated region
    $region34: #{tpu_custom_call.1} parent=1 // pred_check
      _
    $region35: #{tpu_custom_call.1} parent=1 // pred_check_branch
      %251 = sbr.rel (0) target = $region37
    $region36: #{tpu_custom_call.1} parent=1 // pred_region
      %s253 = ssub.s32 128, 128
      %254 = vsyncadd [#allocation4], %s253
      %s256 = sshll.u32 [#allocation8], 4
      %s257 = int_to_ptr.vmem [resolvable:$true] %s256
      %259 = dma.vmem_to_hbm [thread:$0]  %s257, 128, %s5, [#allocation4]
    $region37: #{tpu_custom_call.1} parent=1 // pred_fallthru
      _
    // Predicated region
    $region38: #{tpu_custom_call.1} parent=1 // pred_check
      _
    $region39: #{tpu_custom_call.1} parent=1 // pred_check_branch
      %261 = sbr.rel (0) target = $region41
    $region40: #{tpu_custom_call.1} parent=1 // pred_region
      %262 = dma.done [#allocation4], 128
    $region41: #{tpu_custom_call.1} parent=1 // pred_fallthru
      _
    %263 = vsyncpa [#allocation3], 1
    %264 = vsyncpa [#allocation6], 1
    %265 = vsyncpa [#allocation4], 1

// kernel: tpu_custom_call.1
$region0: #{tpu_custom_call.1}
  #allocation0 [shape = 'u32[]', space=smem, size = 0x4, offset = 0x4, fixed_abs, tag = 'smem constant byte address 0x4 - core index']
  #allocation1 [shape = 'u32[144,128]{1,0:T(1,128)}', space=vmem, size = 0x12000, scoped, tag = 'internal scratch']
  %s0 = inlined_call_operand.hbm [shape: f32[8,128], index: 0, kind: input, shape index: {}]
  %s1 = inlined_call_operand.hbm [shape: f32[128,128], index: 1, kind: input, shape index: {}]
  %s2 = inlined_call_operand.vmem [shape: f32[1,128], index: 2, kind: input, shape index: {}]
  %s3 = inlined_call_operand.hbm [shape: f32[128,128], index: 3, kind: input, shape index: {}]
  %s4 = inlined_call_operand.vmem [shape: f32[1,128], index: 4, kind: input, shape index: {}]
  %s5 = inlined_call_operand.hbm [shape: f32[8,128], index: 5, kind: output, shape index: {}]
  %s6 = sld [smem:[#allocation0]]
  $region42: #{tpu_custom_call.1} parent=0
    _
  %s8 = ssub.s32 1, %s6
  %s9 = scalar_select 0, %s8, %s6
  $region1: #{tpu_custom_call.1} parent=0
    #allocation2 [shape = 'u8[4096]{0}', space=vmem, size = 0x1000, scoped, tag = 'input window, operand 0, single buffered']
    #allocation3 [shape = 's32[1]{0}', space=sflag, size = 0x4, scoped, tag = 'scoped memory for tpu_custom_call.1']
    #allocation4 [shape = 's32[1]{0}', space=sflag, size = 0x4, scoped, tag = 'scoped memory for tpu_custom_call.1']
    #allocation5 [shape = 'u8[65536]{0}', space=vmem, size = 0x10000, scoped, tag = 'input window, operand 1, single buffered']
    #allocation6 [shape = 's32[1]{0}', space=sflag, size = 0x4, scoped, tag = 'scoped memory for tpu_custom_call.1']
    #allocation7 [shape = 'u8[65536]{0}', space=vmem, size = 0x10000, scoped, tag = 'input window, operand 3, single buffered']
    #allocation8 [shape = 'u8[4096]{0}', space=vmem, size = 0x1000, scoped, tag = 'output window, operand 0, single buffered']
    %10 = vsyncpa [#allocation3], 0
    %11 = vsyncpa [#allocation6], 0
    %12 = vsyncpa [#allocation4], 0
    // Predicated region
    $region2: #{tpu_custom_call.1} parent=1 // pred_check
      _
    $region3: #{tpu_custom_call.1} parent=1 // pred_check_branch
      %14 = sbr.rel (0) target = $region5
    $region4: #{tpu_custom_call.1} parent=1 // pred_region
      %s16 = ssub.s32 128, 128
      %17 = vsyncadd [#allocation3], %s16
      %s19 = sshll.u32 [#allocation2], 4
      %s20 = int_to_ptr.vmem [resolvable:$true] %s19
      %22 = dma.hbm_to_vmem [thread:$0]  %s0, 128, %s20, [#allocation3]
    $region5: #{tpu_custom_call.1} parent=1 // pred_fallthru
      _
    // Predicated region
    $region6: #{tpu_custom_call.1} parent=1 // pred_check
      _
    $region7: #{tpu_custom_call.1} parent=1 // pred_check_branch
      %24 = sbr.rel (0) target = $region9
    $region8: #{tpu_custom_call.1} parent=1 // pred_region
      %s26 = ssub.s32 2048, 2048
      %27 = vsyncadd [#allocation6], %s26
      %s28 = sshll.u32 [#allocation5], 4
      %s29 = int_to_ptr.vmem [resolvable:$true] %s28
      %34 = dma.hbm_to_vmem [thread:$0]  %s1, 2048, %s29, [#allocation6], 128, 128, 8
    $region9: #{tpu_custom_call.1} parent=1 // pred_fallthru
      _
    // Predicated region
    $region10: #{tpu_custom_call.1} parent=1 // pred_check
      _
    $region11: #{tpu_custom_call.1} parent=1 // pred_check_branch
      %36 = sbr.rel (0) target = $region13
    $region12: #{tpu_custom_call.1} parent=1 // pred_region
      _
    $region13: #{tpu_custom_call.1} parent=1 // pred_fallthru
      _
    // Predicated region
    $region14: #{tpu_custom_call.1} parent=1 // pred_check
      _
    $region15: #{tpu_custom_call.1} parent=1 // pred_check_branch
      %38 = sbr.rel (0) target = $region17
    $region16: #{tpu_custom_call.1} parent=1 // pred_region
      %s40 = ssub.s32 2048, 2048
      %41 = vsyncadd [#allocation6], %s40
      %s42 = sshll.u32 [#allocation7], 4
      %s43 = int_to_ptr.vmem [resolvable:$true] %s42
      %48 = dma.hbm_to_vmem [thread:$0]  %s3, 2048, %s43, [#allocation6], 128, 128, 8
    $region17: #{tpu_custom_call.1} parent=1 // pred_fallthru
      _
    // Predicated region
    $region18: #{tpu_custom_call.1} parent=1 // pred_check
      _
    $region19: #{tpu_custom_call.1} parent=1 // pred_check_branch
      %50 = sbr.rel (0) target = $region21
    $region20: #{tpu_custom_call.1} parent=1 // pred_region
      _
    $region21: #{tpu_custom_call.1} parent=1 // pred_fallthru
      _
    // Predicated region
    $region22: #{tpu_custom_call.1} parent=1 // pred_check
      _
    $region23: #{tpu_custom_call.1} parent=1 // pred_check_branch
      %52 = sbr.rel (0) target = $region25
    $region24: #{tpu_custom_call.1} parent=1 // pred_region
      %53 = dma.done [#allocation3], 128
    $region25: #{tpu_custom_call.1} parent=1 // pred_fallthru
      _
    // Predicated region
    $region26: #{tpu_custom_call.1} parent=1 // pred_check
      _
    $region27: #{tpu_custom_call.1} parent=1 // pred_check_branch
      %55 = sbr.rel (0) target = $region29
    $region28: #{tpu_custom_call.1} parent=1 // pred_region
      %56 = dma.done [#allocation6], 2048
    $region29: #{tpu_custom_call.1} parent=1 // pred_fallthru
      _
    // Predicated region
    $region30: #{tpu_custom_call.1} parent=1 // pred_check
      _
    $region31: #{tpu_custom_call.1} parent=1 // pred_check_branch
      %58 = sbr.rel (0) target = $region33
    $region32: #{tpu_custom_call.1} parent=1 // pred_region
      %59 = dma.done [#allocation6], 2048
    $region33: #{tpu_custom_call.1} parent=1 // pred_fallthru
      _
    %v60 = vld [vmem:[#allocation2] sm:$0xff]
    %v61 = vld [vmem:[#allocation5] sm:$0xff]
    %v62 = vld [vmem:[#allocation5 + $0x8] sm:$0xff]
    %v63 = vld [vmem:[#allocation5 + $0x10] sm:$0xff]
    %v64 = vld [vmem:[#allocation5 + $0x18] sm:$0xff]
    %v65 = vld [vmem:[#allocation5 + $0x20] sm:$0xff]
    %v66 = vld [vmem:[#allocation5 + $0x28] sm:$0xff]
    %v67 = vld [vmem:[#allocation5 + $0x30] sm:$0xff]
    %v68 = vld [vmem:[#allocation5 + $0x38] sm:$0xff]
    %v69 = vld [vmem:[#allocation5 + $0x40] sm:$0xff]
    %v70 = vld [vmem:[#allocation5 + $0x48] sm:$0xff]
    %v71 = vld [vmem:[#allocation5 + $0x50] sm:$0xff]
    %v72 = vld [vmem:[#allocation5 + $0x58] sm:$0xff]
    %v73 = vld [vmem:[#allocation5 + $0x60] sm:$0xff]
    %v74 = vld [vmem:[#allocation5 + $0x68] sm:$0xff]
    %v75 = vld [vmem:[#allocation5 + $0x70] sm:$0xff]
    %v76 = vld [vmem:[#allocation5 + $0x78] sm:$0xff]
    %v77 = vld [vmem:[%s2] sm:$0x1]
    %v79 = vlaneseq
    %v80 = vshrl.u32 %v79, 7
    %v81 = vsub.s32 0, %v80
    %v82 = vrot.slane %v77, %v81
    %84 = vmatprep.subr.mxu0 0.0
    %85 = vmatpush1.msra.mxu0 %v61
    %86 = vmatprep.subr.mxu0 0.0
    %87 = vmatpush1.msra.mxu0 %v62
    %88 = vmatprep.subr.mxu0 0.0
    %89 = vmatpush1.msra.mxu0 %v63
    %90 = vmatprep.subr.mxu0 0.0
    %91 = vmatpush1.msra.mxu0 %v64
    %92 = vmatprep.subr.mxu0 0.0
    %93 = vmatpush1.msra.mxu0 %v65
    %94 = vmatprep.subr.mxu0 0.0
    %95 = vmatpush1.msra.mxu0 %v66
    %96 = vmatprep.subr.mxu0 0.0
    %97 = vmatpush1.msra.mxu0 %v67
    %98 = vmatprep.subr.mxu0 0.0
    %99 = vmatpush1.msra.mxu0 %v68
    %100 = vmatprep.subr.mxu0 0.0
    %101 = vmatpush1.msra.mxu0 %v69
    %102 = vmatprep.subr.mxu0 0.0
    %103 = vmatpush1.msra.mxu0 %v70
    %104 = vmatprep.subr.mxu0 0.0
    %105 = vmatpush1.msra.mxu0 %v71
    %106 = vmatprep.subr.mxu0 0.0
    %107 = vmatpush1.msra.mxu0 %v72
    %108 = vmatprep.subr.mxu0 0.0
    %109 = vmatpush1.msra.mxu0 %v73
    %110 = vmatprep.subr.mxu0 0.0
    %111 = vmatpush1.msra.mxu0 %v74
    %112 = vmatprep.subr.mxu0 0.0
    %113 = vmatpush1.msra.mxu0 %v75
    %114 = vmatprep.subr.mxu0 0.0
    %115 = vmatpush1.msra.mxu0 %v76
    %116 = vmatprep.subr.mxu0 0.0
    %117 = vmatpush1.msra.mxu0 0.0
    %118 = vmatprep.subr.mxu0 0.0
    %119 = vmatpush1.msra.mxu0 0.0
    %120 = vmatprep.subr.mxu0 0.0
    %121 = vmatpush1.msra.mxu0 0.0
    %122 = vmatprep.subr.mxu0 0.0
    %123 = vmatpush1.msra.mxu0 0.0
    %124 = vmatprep.subr.mxu0 0.0
    %125 = vmatpush1.msra.mxu0 0.0
    %126 = vmatprep.subr.mxu0 0.0
    %127 = vmatpush1.msra.mxu0 0.0
    %128 = vmatprep.subr.mxu0 0.0
    %129 = vmatpush1.msra.mxu0 0.0
    %130 = vmatprep.subr.mxu0 0.0
    %131 = vmatpush1.msra.mxu0 0.0
    %132 = vmatprep.subr.mxu0 0.0
    %133 = vmatpush1.msra.mxu0 0.0
    %134 = vmatprep.subr.mxu0 0.0
    %135 = vmatpush1.msra.mxu0 0.0
    %136 = vmatprep.subr.mxu0 0.0
    %137 = vmatpush1.msra.mxu0 0.0
    %138 = vmatprep.subr.mxu0 0.0
    %139 = vmatpush1.msra.mxu0 0.0
    %140 = vmatprep.subr.mxu0 0.0
    %141 = vmatpush1.msra.mxu0 0.0
    %142 = vmatprep.subr.mxu0 0.0
    %143 = vmatpush1.msra.mxu0 0.0
    %144 = vmatprep.subr.mxu0 0.0
    %145 = vmatpush1.msra.mxu0 0.0
    %146 = vmatprep.subr.mxu0 0.0
    %147 = vmatpush1.msra.mxu0 0.0
    %148 = vmatprep.mubr.f32.mxu0 0.0
    %149 = vmatmul.mubr.f32.gmra.mrb[0].mxu0 %v60
    %v150 = vpop.f32.mrb[0].mxu0
    %v151 = vadd.f32 %v82, %v150
    %v152 = vpop.f32.mrb[0].mxu0
    %153 = vdwg.mxu0
    %v154 = vmul.f32 %v151, 0.01
    %v155 = vmax.f32 %v151, %v154
    %v156 = vld [vmem:[#allocation7] sm:$0xff]
    %v157 = vld [vmem:[#allocation7 + $0x8] sm:$0xff]
    %v158 = vld [vmem:[#allocation7 + $0x10] sm:$0xff]
    %v159 = vld [vmem:[#allocation7 + $0x18] sm:$0xff]
    %v160 = vld [vmem:[#allocation7 + $0x20] sm:$0xff]
    %v161 = vld [vmem:[#allocation7 + $0x28] sm:$0xff]
    %v162 = vld [vmem:[#allocation7 + $0x30] sm:$0xff]
    %v163 = vld [vmem:[#allocation7 + $0x38] sm:$0xff]
    %v164 = vld [vmem:[#allocation7 + $0x40] sm:$0xff]
    %v165 = vld [vmem:[#allocation7 + $0x48] sm:$0xff]
    %v166 = vld [vmem:[#allocation7 + $0x50] sm:$0xff]
    %v167 = vld [vmem:[#allocation7 + $0x58] sm:$0xff]
    %v168 = vld [vmem:[#allocation7 + $0x60] sm:$0xff]
    %v169 = vld [vmem:[#allocation7 + $0x68] sm:$0xff]
    %v170 = vld [vmem:[#allocation7 + $0x70] sm:$0xff]
    %v171 = vld [vmem:[#allocation7 + $0x78] sm:$0xff]
    %v172 = vld [vmem:[%s4] sm:$0x1]
    %v174 = vlaneseq
    %v175 = vshrl.u32 %v174, 7
    %v176 = vsub.s32 0, %v175
    %v177 = vrot.slane %v172, %v176
    %179 = vmatprep.subr.mxu0 0.0
    %180 = vmatpush1.msra.mxu0 %v156
    %181 = vmatprep.subr.mxu0 0.0
    %182 = vmatpush1.msra.mxu0 %v157
    %183 = vmatprep.subr.mxu0 0.0
    %184 = vmatpush1.msra.mxu0 %v158
    %185 = vmatprep.subr.mxu0 0.0
    %186 = vmatpush1.msra.mxu0 %v159
    %187 = vmatprep.subr.mxu0 0.0
    %188 = vmatpush1.msra.mxu0 %v160
    %189 = vmatprep.subr.mxu0 0.0
    %190 = vmatpush1.msra.mxu0 %v161
    %191 = vmatprep.subr.mxu0 0.0
    %192 = vmatpush1.msra.mxu0 %v162
    %193 = vmatprep.subr.mxu0 0.0
    %194 = vmatpush1.msra.mxu0 %v163
    %195 = vmatprep.subr.mxu0 0.0
    %196 = vmatpush1.msra.mxu0 %v164
    %197 = vmatprep.subr.mxu0 0.0
    %198 = vmatpush1.msra.mxu0 %v165
    %199 = vmatprep.subr.mxu0 0.0
    %200 = vmatpush1.msra.mxu0 %v166
    %201 = vmatprep.subr.mxu0 0.0
    %202 = vmatpush1.msra.mxu0 %v167
    %203 = vmatprep.subr.mxu0 0.0
    %204 = vmatpush1.msra.mxu0 %v168
    %205 = vmatprep.subr.mxu0 0.0
    %206 = vmatpush1.msra.mxu0 %v169
    %207 = vmatprep.subr.mxu0 0.0
    %208 = vmatpush1.msra.mxu0 %v170
    %209 = vmatprep.subr.mxu0 0.0
    %210 = vmatpush1.msra.mxu0 %v171
    %211 = vmatprep.subr.mxu0 0.0
    %212 = vmatpush1.msra.mxu0 0.0
    %213 = vmatprep.subr.mxu0 0.0
    %214 = vmatpush1.msra.mxu0 0.0
    %215 = vmatprep.subr.mxu0 0.0
    %216 = vmatpush1.msra.mxu0 0.0
    %217 = vmatprep.subr.mxu0 0.0
    %218 = vmatpush1.msra.mxu0 0.0
    %219 = vmatprep.subr.mxu0 0.0
    %220 = vmatpush1.msra.mxu0 0.0
    %221 = vmatprep.subr.mxu0 0.0
    %222 = vmatpush1.msra.mxu0 0.0
    %223 = vmatprep.subr.mxu0 0.0
    %224 = vmatpush1.msra.mxu0 0.0
    %225 = vmatprep.subr.mxu0 0.0
    %226 = vmatpush1.msra.mxu0 0.0
    %227 = vmatprep.subr.mxu0 0.0
    %228 = vmatpush1.msra.mxu0 0.0
    %229 = vmatprep.subr.mxu0 0.0
    %230 = vmatpush1.msra.mxu0 0.0
    %231 = vmatprep.subr.mxu0 0.0
    %232 = vmatpush1.msra.mxu0 0.0
    %233 = vmatprep.subr.mxu0 0.0
    %234 = vmatpush1.msra.mxu0 0.0
    %235 = vmatprep.subr.mxu0 0.0
    %236 = vmatpush1.msra.mxu0 0.0
    %237 = vmatprep.subr.mxu0 0.0
    %238 = vmatpush1.msra.mxu0 0.0
    %239 = vmatprep.subr.mxu0 0.0
    %240 = vmatpush1.msra.mxu0 0.0
    %241 = vmatprep.subr.mxu0 0.0
    %242 = vmatpush1.msra.mxu0 0.0
    %243 = vmatprep.mubr.f32.mxu0 0.0
    %244 = vmatmul.mubr.f32.gmra.mrb[0].mxu0 %v155
    %v245 = vpop.f32.mrb[0].mxu0
    %v246 = vadd.f32 %v177, %v245
    %v247 = vpop.f32.mrb[0].mxu0
    %248 = vdwg.mxu0
    %249 = vst [vmem:[#allocation8] sm:$0xff] %v246
    // Predicated region
    $region34: #{tpu_custom_call.1} parent=1 // pred_check
      _
    $region35: #{tpu_custom_call.1} parent=1 // pred_check_branch
      %251 = sbr.rel (0) target = $region37
    $region36: #{tpu_custom_call.1} parent=1 // pred_region
      %s253 = ssub.s32 128, 128
      %254 = vsyncadd [#allocation4], %s253
      %s256 = sshll.u32 [#allocation8], 4
      %s257 = int_to_ptr.vmem [resolvable:$true] %s256
      %259 = dma.vmem_to_hbm [thread:$0]  %s257, 128, %s5, [#allocation4]
    $region37: #{tpu_custom_call.1} parent=1 // pred_fallthru
      _
    // Predicated region
    $region38: #{tpu_custom_call.1} parent=1 // pred_check
      _
    $region39: #{tpu_custom_call.1} parent=1 // pred_check_branch
      %261 = sbr.rel (0) target = $region41
    $region40: #{tpu_custom_call.1} parent=1 // pred_region
      %262 = dma.done [#allocation4], 128
    $region41: #{tpu_custom_call.1} parent=1 // pred_fallthru
      _
    %263 = vsyncpa [#allocation3], 1
    %264 = vsyncpa [#allocation6], 1
    %265 = vsyncpa [#allocation4], 1

</llo_original>
